<compile_context>
chip_gen: v6e
topology: v6e:2x2x1
jax: 0.10.0
libtpu: 0.0.40
codegen_flags: <defaults>
</compile_context>

<pallas_src>
import functools

import jax
import jax.numpy as jnp
import numpy as np
from jax import lax
from jax.experimental import pallas as pl
from jax.experimental.pallas import tpu as pltpu

_EPS = 1e-5


def _bottleneck_kernel(x_ref, p_ref, out_ref, *, N, Cin, Cmid, Cexp):
    """Fused BottleNeck forward for 1x1 spatial inputs (channels on lanes)."""
    f32 = jnp.float32

    # ---- unpack the single packed parameter slab --------------------------
    o2 = Cin                 # end of w1 rows
    o3 = o2 + 9 * Cmid       # end of w2 (im2col) rows
    ob = o3 + Cmid           # end of w3 rows / start of BN rows
    w1 = p_ref[0:o2, 0:Cmid]               # (Cin, Cmid)
    w2 = p_ref[o2:o3, 0:Cmid]              # (9*Cmid, Cmid)  im2col layout
    w3 = p_ref[o3:ob, 0:Cexp]              # (Cmid, Cexp)
    g1 = p_ref[ob + 0:ob + 1, 0:Cmid]      # (1, Cmid)
    b1 = p_ref[ob + 1:ob + 2, 0:Cmid]
    g2 = p_ref[ob + 2:ob + 3, 0:Cmid]
    b2 = p_ref[ob + 3:ob + 4, 0:Cmid]
    g3 = p_ref[ob + 4:ob + 5, 0:Cexp]      # (1, Cexp)
    b3 = p_ref[ob + 5:ob + 6, 0:Cexp]

    x = x_ref[...]                          # (N, Cin), H=W=1

    # ---- conv1 (1x1, padding=1) + BN1(train) + ReLU ------------------------
    # Padded conv1 output is (N, 3, 3, Cmid): centre = x @ w1, border = 0.
    core1 = jnp.dot(x, w1, preferred_element_type=f32)            # (N, Cmid)
    t1 = float(N * 9)                       # elements per channel in BN1
    z1 = float(N * 9 - N)                   # zero-border element count
    mu1 = jnp.sum(core1, axis=0, keepdims=True) / t1              # (1, Cmid)
    d1 = core1 - mu1
    var1 = (jnp.sum(d1 * d1, axis=0, keepdims=True) + z1 * mu1 * mu1) / t1
    inv1 = lax.rsqrt(var1 + _EPS)
    r1_core = jnp.maximum(d1 * inv1 * g1 + b1, 0.0)               # (N, Cmid)
    c1 = jnp.maximum(b1 - g1 * mu1 * inv1, 0.0)                   # border value

    # ---- conv2 (3x3, padding=1) as a single im2col matmul ------------------
    # Build the 5x5 padded conv2 input as a value: zero outer ring, then the
    # conv1 zero-border-after-BN constant ring, centre = r1_core.
    q4 = r1_core.reshape(N, 1, 1, Cmid)
    c1b = jnp.broadcast_to(c1.reshape(1, 1, 1, Cmid), (N, 1, 1, Cmid))
    mid = jnp.concatenate([c1b, q4, c1b], axis=2)                 # (N,1,3,Cm)
    crow = jnp.broadcast_to(c1.reshape(1, 1, 1, Cmid), (N, 1, 3, Cmid))
    r1_full = jnp.concatenate([crow, mid, crow], axis=1)          # (N,3,3,Cm)
    zr = jnp.zeros((N, 1, 3, Cmid), f32)
    tall = jnp.concatenate([zr, r1_full, zr], axis=1)             # (N,5,3,Cm)
    zc = jnp.zeros((N, 5, 1, Cmid), f32)
    p2 = jnp.concatenate([zc, tall, zc], axis=2)                  # (N,5,5,Cm)

    patches = jnp.concatenate(
        [p2[:, dy:dy + 3, dx:dx + 3, :] for dy in range(3) for dx in range(3)],
        axis=3)                                                   # (N,3,3,9*Cm)
    y2 = jnp.dot(patches.reshape(N * 9, 9 * Cmid), w2,
                 preferred_element_type=f32)                      # (N*9, Cmid)

    # ---- BN2(train) + ReLU (no artificial border here) ---------------------
    mu2 = jnp.mean(y2, axis=0, keepdims=True)
    d2 = y2 - mu2
    var2 = jnp.mean(d2 * d2, axis=0, keepdims=True)
    inv2 = lax.rsqrt(var2 + _EPS)
    r2 = jnp.maximum(d2 * inv2 * g2 + b2, 0.0)                    # (N*9, Cmid)

    # ---- conv3 (1x1, padding=1) + BN3(train) --------------------------------
    # Padded conv3 output is (N, 5, 5, Cexp): interior = r2 @ w3, border = 0.
    core3 = jnp.dot(r2, w3, preferred_element_type=f32)           # (N*9, Cexp)
    t3 = float(N * 25)
    z3 = float(N * 25 - N * 9)
    mu3 = jnp.sum(core3, axis=0, keepdims=True) / t3              # (1, Cexp)
    d3 = core3 - mu3
    var3 = (jnp.sum(d3 * d3, axis=0, keepdims=True) + z3 * mu3 * mu3) / t3
    inv3 = lax.rsqrt(var3 + _EPS)
    y3_core = d3 * inv3 * g3 + b3                                 # (N*9, Cexp)
    c3 = b3 - g3 * mu3 * inv3                                     # border value

    # ---- residual add (x broadcasts over spatial) + ReLU, assemble output ---
    inter = jnp.maximum(y3_core.reshape(N, 3, 3, Cexp)
                        + x.reshape(N, 1, 1, Cexp), 0.0)          # (N,3,3,Cexp)
    bord = jnp.maximum(c3 + x, 0.0).reshape(N, 1, 1, Cexp)        # (N,1,1,Cexp)
    rowb = jnp.broadcast_to(bord, (N, 1, 3, Cexp))
    tcol = jnp.concatenate([rowb, inter, rowb], axis=1)           # (N,5,3,Cexp)
    colb = jnp.broadcast_to(bord, (N, 5, 1, Cexp))
    out_ref[...] = jnp.concatenate([colb, tcol, colb], axis=2)    # (N,5,5,Cexp)


def bottleneck_forward(x_nchw, params):
    """Pallas BottleNeck forward.  Input/output are NCHW like PyTorch."""
    N, Cin, H, W = x_nchw.shape
    w1, w2, w3 = params["w1"], params["w2"], params["w3"]
    Cmid, Cexp = w1.shape[1], w3.shape[1]

    # With downsample=None the PyTorch forward only runs when the residual
    # broadcast is legal: 1x1 spatial input and in_features == 4*out_features.
    assert H == 1 and W == 1, "BottleNeck(downsample=None) needs 1x1 spatial input"
    assert Cin == Cexp, "BottleNeck(downsample=None) needs in_features == 4*out_features"
    # TODO(synk): the `downsample is not None` branch (arbitrary nn.Module) is
    # not implemented; the PyTorch default (downsample=None) is modelled here.

    H2, W2 = H + 4, W + 4

    # NCHW -> (N, C) is free for H = W = 1 (no transpose needed).
    x2d = x_nchw.reshape(N, Cin).astype(jnp.float32)

    # Pack every conv / BN parameter into ONE (rows, Cexp) slab -> 1 input DMA.
    o2 = Cin
    o3 = o2 + 9 * Cmid
    ob = o3 + Cmid
    rows = ob + 6
    pk = jnp.zeros((rows, Cexp), jnp.float32)
    pk = pk.at[:o2, :Cmid].set(w1.astype(jnp.float32))
    pk = pk.at[o2:o3, :Cmid].set(w2.reshape(9 * Cmid, Cmid).astype(jnp.float32))
    pk = pk.at[o3:ob, :Cexp].set(w3.astype(jnp.float32))
    pk = pk.at[ob + 0, :Cmid].set(params["g1"].astype(jnp.float32))
    pk = pk.at[ob + 1, :Cmid].set(params["b1"].astype(jnp.float32))
    pk = pk.at[ob + 2, :Cmid].set(params["g2"].astype(jnp.float32))
    pk = pk.at[ob + 3, :Cmid].set(params["b2"].astype(jnp.float32))
    pk = pk.at[ob + 4, :Cexp].set(params["g3"].astype(jnp.float32))
    pk = pk.at[ob + 5, :Cexp].set(params["b3"].astype(jnp.float32))

    flops = 2 * (N * Cin * Cmid + N * 9 * 9 * Cmid * Cmid + N * 9 * Cmid * Cexp)
    bytes_accessed = 4 * (x2d.size + pk.size + N * H2 * W2 * Cexp)

    out_nhwc = pl.pallas_call(
        functools.partial(_bottleneck_kernel, N=N, Cin=Cin, Cmid=Cmid, Cexp=Cexp),
        out_shape=jax.ShapeDtypeStruct((N, H2, W2, Cexp), jnp.float32),
        in_specs=[pl.BlockSpec(memory_space=pltpu.MemorySpace.VMEM)] * 2,
        out_specs=pl.BlockSpec(memory_space=pltpu.MemorySpace.VMEM),
        cost_estimate=pl.CostEstimate(flops=flops, transcendentals=3 * Cexp,
                                      bytes_accessed=bytes_accessed),
    )(x2d, pk)

    return jnp.transpose(out_nhwc, (0, 3, 1, 2))                  # NHWC -> NCHW


def reference_forward(x_nchw, p):
    """Pure-JAX reference with the module's exact (unusual) semantics."""
    def bn(y, g, b):
        mu = jnp.mean(y, axis=(0, 1, 2), keepdims=True)
        var = jnp.mean((y - mu) ** 2, axis=(0, 1, 2), keepdims=True)
        return ((y - mu) * lax.rsqrt(var + _EPS) * g.reshape(1, 1, 1, -1)
                + b.reshape(1, 1, 1, -1))

    x = jnp.transpose(x_nchw, (0, 2, 3, 1)).astype(jnp.float32)   # NHWC
    N, H, W, _ = x.shape
    H1, W1 = H + 2, W + 2

    y1 = jnp.pad(jnp.einsum("nhwc,cd->nhwd", x, p["w1"]),
                 ((0, 0), (1, 1), (1, 1), (0, 0)))
    r1 = jnp.maximum(bn(y1, p["g1"], p["b1"]), 0.0)

    p2 = jnp.pad(r1, ((0, 0), (1, 1), (1, 1), (0, 0)))
    Cmid = p["w2"].shape[3]
    acc = jnp.zeros((N, H1, W1, Cmid), jnp.float32)
    for dy in range(3):
        for dx in range(3):
            acc = acc + jnp.einsum("nhwc,cd->nhwd",
                                   p2[:, dy:dy + H1, dx:dx + W1, :],
                                   p["w2"][dy, dx])
    r2 = jnp.maximum(bn(acc, p["g2"], p["b2"]), 0.0)

    y3 = jnp.pad(jnp.einsum("nhwc,cd->nhwd", r2, p["w3"]),
                 ((0, 0), (1, 1), (1, 1), (0, 0)))
    y3 = bn(y3, p["g3"], p["b3"])
    out = jnp.maximum(y3 + x, 0.0)
    return jnp.transpose(out, (0, 3, 1, 2))


if __name__ == "__main__":
    # downsample=None => the PyTorch forward only runs with 1x1 spatial input
    # and in_features == 4 * out_features (see wrapper asserts).
    N, Cin, H, W = 2, 16, 1, 1
    Cout = 4
    Cexp = 4 * Cout            # expansion = 4

    key = jax.random.PRNGKey(0)
    ks = jax.random.split(key, 10)
    params = {
        "w1": 0.1 * jax.random.normal(ks[0], (Cin, Cout), jnp.float32),
        "w2": 0.1 * jax.random.normal(ks[1], (3, 3, Cout, Cout), jnp.float32),
        "w3": 0.1 * jax.random.normal(ks[2], (Cout, Cexp), jnp.float32),
        "g1": 1.0 + 0.1 * jax.random.normal(ks[3], (Cout,), jnp.float32),
        "b1": 0.1 * jax.random.normal(ks[4], (Cout,), jnp.float32),
        "g2": 1.0 + 0.1 * jax.random.normal(ks[5], (Cout,), jnp.float32),
        "b2": 0.1 * jax.random.normal(ks[6], (Cout,), jnp.float32),
        "g3": 1.0 + 0.1 * jax.random.normal(ks[7], (Cexp,), jnp.float32),
        "b3": 0.1 * jax.random.normal(ks[8], (Cexp,), jnp.float32),
    }
    x = jax.random.normal(ks[9], (N, Cin, H, W), jnp.float32)

    fwd = jax.jit(bottleneck_forward)
    out = jax.block_until_ready(fwd(x, params))
    ref = reference_forward(x, params)

    assert out.shape == (N, Cexp, H + 4, W + 4), out.shape
    np.testing.assert_allclose(np.asarray(out), np.asarray(ref),
                               rtol=1e-5, atol=1e-5)
    print("KERNEL_OK")
</pallas_src>

<mosaic_0001>
module attributes {stable_mosaic.version = 11 : i64} {
  func.func @_bottleneck_kernel(%arg0: memref<2x16xf32, #tpu.memory_space<vmem>>, %arg1: memref<62x16xf32, #tpu.memory_space<vmem>>, %arg2: memref<2x5x5x16xf32, #tpu.memory_space<vmem>>) attributes {dimension_semantics = [], scalar_prefetch = 0 : i64, scratch_operands = 0 : i64, tpu.core_type = #tpu.core_type<tc>} {
    %c0 = arith.constant 0 : index
    %c0_0 = arith.constant 0 : index
    %0 = vector.load %arg1[%c0, %c0_0] : memref<62x16xf32, #tpu.memory_space<vmem>>, vector<16x4xf32>
    %c16 = arith.constant 16 : index
    %c0_1 = arith.constant 0 : index
    %1 = vector.load %arg1[%c16, %c0_1] : memref<62x16xf32, #tpu.memory_space<vmem>>, vector<36x4xf32>
    %c52 = arith.constant 52 : index
    %c0_2 = arith.constant 0 : index
    %2 = vector.load %arg1[%c52, %c0_2] : memref<62x16xf32, #tpu.memory_space<vmem>>, vector<4x16xf32>
    %c56 = arith.constant 56 : index
    %c0_3 = arith.constant 0 : index
    %3 = vector.load %arg1[%c56, %c0_3] : memref<62x16xf32, #tpu.memory_space<vmem>>, vector<1x4xf32>
    %c57 = arith.constant 57 : index
    %c0_4 = arith.constant 0 : index
    %4 = vector.load %arg1[%c57, %c0_4] : memref<62x16xf32, #tpu.memory_space<vmem>>, vector<1x4xf32>
    %c58 = arith.constant 58 : index
    %c0_5 = arith.constant 0 : index
    %5 = vector.load %arg1[%c58, %c0_5] : memref<62x16xf32, #tpu.memory_space<vmem>>, vector<1x4xf32>
    %c59 = arith.constant 59 : index
    %c0_6 = arith.constant 0 : index
    %6 = vector.load %arg1[%c59, %c0_6] : memref<62x16xf32, #tpu.memory_space<vmem>>, vector<1x4xf32>
    %c60 = arith.constant 60 : index
    %c0_7 = arith.constant 0 : index
    %7 = vector.load %arg1[%c60, %c0_7] : memref<62x16xf32, #tpu.memory_space<vmem>>, vector<1x16xf32>
    %c61 = arith.constant 61 : index
    %c0_8 = arith.constant 0 : index
    %8 = vector.load %arg1[%c61, %c0_8] : memref<62x16xf32, #tpu.memory_space<vmem>>, vector<1x16xf32>
    %c0_9 = arith.constant 0 : index
    %c0_10 = arith.constant 0 : index
    %9 = vector.load %arg0[%c0_9, %c0_10] : memref<2x16xf32, #tpu.memory_space<vmem>>, vector<2x16xf32>
    %cst = arith.constant dense<0.000000e+00> : vector<2x4xf32>
    %10 = tpu.matmul %9, %0, %cst {dimension_numbers = #tpu.dot_dimension_numbers<[1], [0], [0], [1], [0, 0, 1, 1], [], []>} : vector<2x16xf32>, vector<16x4xf32>, vector<2x4xf32> -> vector<2x4xf32>
    %cst_11 = arith.constant dense<0.000000e+00> : vector<4xf32>
    %11 = vector.multi_reduction <add>, %10, %cst_11 [0] : vector<2x4xf32> to vector<4xf32>
    %12 = vector.shape_cast %11 : vector<4xf32> to vector<1x4xf32>
    %cst_12 = arith.constant 1.800000e+01 : f32
    %13 = vector.broadcast %cst_12 : f32 to vector<1x4xf32>
    %14 = arith.divf %12, %13 : vector<1x4xf32>
    %15 = vector.broadcast %14 : vector<1x4xf32> to vector<2x4xf32>
    %16 = arith.subf %10, %15 : vector<2x4xf32>
    %17 = arith.mulf %16, %16 : vector<2x4xf32>
    %cst_13 = arith.constant dense<0.000000e+00> : vector<4xf32>
    %18 = vector.multi_reduction <add>, %17, %cst_13 [0] : vector<2x4xf32> to vector<4xf32>
    %19 = vector.shape_cast %18 : vector<4xf32> to vector<1x4xf32>
    %cst_14 = arith.constant 1.600000e+01 : f32
    %20 = vector.broadcast %cst_14 : f32 to vector<1x4xf32>
    %21 = arith.mulf %20, %14 : vector<1x4xf32>
    %22 = arith.mulf %21, %14 : vector<1x4xf32>
    %23 = arith.addf %19, %22 : vector<1x4xf32>
    %cst_15 = arith.constant 1.800000e+01 : f32
    %24 = vector.broadcast %cst_15 : f32 to vector<1x4xf32>
    %25 = arith.divf %23, %24 : vector<1x4xf32>
    %cst_16 = arith.constant 9.99999974E-6 : f32
    %26 = vector.broadcast %cst_16 : f32 to vector<1x4xf32>
    %27 = arith.addf %25, %26 : vector<1x4xf32>
    %28 = math.rsqrt %27 : vector<1x4xf32>
    %29 = vector.broadcast %28 : vector<1x4xf32> to vector<2x4xf32>
    %30 = arith.mulf %16, %29 : vector<2x4xf32>
    %31 = vector.broadcast %3 : vector<1x4xf32> to vector<2x4xf32>
    %32 = arith.mulf %30, %31 : vector<2x4xf32>
    %33 = vector.broadcast %4 : vector<1x4xf32> to vector<2x4xf32>
    %34 = arith.addf %32, %33 : vector<2x4xf32>
    %cst_17 = arith.constant 0.000000e+00 : f32
    %35 = vector.broadcast %cst_17 : f32 to vector<2x4xf32>
    %36 = arith.maximumf %34, %35 : vector<2x4xf32>
    %37 = arith.mulf %3, %14 : vector<1x4xf32>
    %38 = arith.mulf %37, %28 : vector<1x4xf32>
    %39 = arith.subf %4, %38 : vector<1x4xf32>
    %cst_18 = arith.constant 0.000000e+00 : f32
    %40 = vector.broadcast %cst_18 : f32 to vector<1x4xf32>
    %41 = arith.maximumf %39, %40 : vector<1x4xf32>
    %42 = vector.shape_cast %36 : vector<2x4xf32> to vector<2x1x1x4xf32>
    %43 = vector.shape_cast %41 : vector<1x4xf32> to vector<1x1x1x4xf32>
    %44 = vector.shape_cast %43 : vector<1x1x1x4xf32> to vector<1x1x1x4xf32>
    %45 = vector.broadcast %44 : vector<1x1x1x4xf32> to vector<2x1x1x4xf32>
    %46 = tpu.concatenate %45, %42, %45 in 2 : vector<2x1x1x4xf32>, vector<2x1x1x4xf32>, vector<2x1x1x4xf32> -> vector<2x1x3x4xf32>
    %47 = vector.shape_cast %41 : vector<1x4xf32> to vector<1x1x1x4xf32>
    %48 = vector.shape_cast %47 : vector<1x1x1x4xf32> to vector<1x1x1x4xf32>
    %49 = vector.broadcast %48 : vector<1x1x1x4xf32> to vector<2x1x3x4xf32>
    %50 = tpu.concatenate %49, %46, %49 in 1 : vector<2x1x3x4xf32>, vector<2x1x3x4xf32>, vector<2x1x3x4xf32> -> vector<2x3x3x4xf32>
    %cst_19 = arith.constant 0.000000e+00 : f32
    %51 = vector.broadcast %cst_19 : f32 to vector<2x1x3x4xf32>
    %52 = tpu.concatenate %51, %50, %51 in 1 : vector<2x1x3x4xf32>, vector<2x3x3x4xf32>, vector<2x1x3x4xf32> -> vector<2x5x3x4xf32>
    %cst_20 = arith.constant 0.000000e+00 : f32
    %53 = vector.broadcast %cst_20 : f32 to vector<2x5x1x4xf32>
    %54 = tpu.concatenate %53, %52, %53 in 2 : vector<2x5x1x4xf32>, vector<2x5x3x4xf32>, vector<2x5x1x4xf32> -> vector<2x5x5x4xf32>
    %55 = vector.extract_strided_slice %54 {offsets = [0, 0, 0, 0], sizes = [2, 3, 3, 4], strides = [1, 1, 1, 1]} : vector<2x5x5x4xf32> to vector<2x3x3x4xf32>
    %56 = vector.extract_strided_slice %54 {offsets = [0, 0, 1, 0], sizes = [2, 3, 3, 4], strides = [1, 1, 1, 1]} : vector<2x5x5x4xf32> to vector<2x3x3x4xf32>
    %57 = vector.extract_strided_slice %54 {offsets = [0, 0, 2, 0], sizes = [2, 3, 3, 4], strides = [1, 1, 1, 1]} : vector<2x5x5x4xf32> to vector<2x3x3x4xf32>
    %58 = vector.extract_strided_slice %54 {offsets = [0, 1, 0, 0], sizes = [2, 3, 3, 4], strides = [1, 1, 1, 1]} : vector<2x5x5x4xf32> to vector<2x3x3x4xf32>
    %59 = vector.extract_strided_slice %54 {offsets = [0, 1, 1, 0], sizes = [2, 3, 3, 4], strides = [1, 1, 1, 1]} : vector<2x5x5x4xf32> to vector<2x3x3x4xf32>
    %60 = vector.extract_strided_slice %54 {offsets = [0, 1, 2, 0], sizes = [2, 3, 3, 4], strides = [1, 1, 1, 1]} : vector<2x5x5x4xf32> to vector<2x3x3x4xf32>
    %61 = vector.extract_strided_slice %54 {offsets = [0, 2, 0, 0], sizes = [2, 3, 3, 4], strides = [1, 1, 1, 1]} : vector<2x5x5x4xf32> to vector<2x3x3x4xf32>
    %62 = vector.extract_strided_slice %54 {offsets = [0, 2, 1, 0], sizes = [2, 3, 3, 4], strides = [1, 1, 1, 1]} : vector<2x5x5x4xf32> to vector<2x3x3x4xf32>
    %63 = vector.extract_strided_slice %54 {offsets = [0, 2, 2, 0], sizes = [2, 3, 3, 4], strides = [1, 1, 1, 1]} : vector<2x5x5x4xf32> to vector<2x3x3x4xf32>
    %64 = tpu.concatenate %55, %56, %57, %58, %59, %60, %61, %62, %63 in 3 : vector<2x3x3x4xf32>, vector<2x3x3x4xf32>, vector<2x3x3x4xf32>, vector<2x3x3x4xf32>, vector<2x3x3x4xf32>, vector<2x3x3x4xf32>, vector<2x3x3x4xf32>, vector<2x3x3x4xf32>, vector<2x3x3x4xf32> -> vector<2x3x3x36xf32>
    %65 = vector.shape_cast %64 : vector<2x3x3x36xf32> to vector<18x36xf32>
    %cst_21 = arith.constant dense<0.000000e+00> : vector<18x4xf32>
    %66 = tpu.matmul %65, %1, %cst_21 {dimension_numbers = #tpu.dot_dimension_numbers<[1], [0], [0], [1], [0, 0, 1, 1], [], []>} : vector<18x36xf32>, vector<36x4xf32>, vector<18x4xf32> -> vector<18x4xf32>
    %cst_22 = arith.constant dense<0.000000e+00> : vector<4xf32>
    %67 = vector.multi_reduction <add>, %66, %cst_22 [0] : vector<18x4xf32> to vector<4xf32>
    %68 = vector.shape_cast %67 : vector<4xf32> to vector<1x4xf32>
    %cst_23 = arith.constant 1.800000e+01 : f32
    %69 = vector.broadcast %cst_23 : f32 to vector<1x4xf32>
    %70 = arith.divf %68, %69 : vector<1x4xf32>
    %71 = vector.broadcast %70 : vector<1x4xf32> to vector<18x4xf32>
    %72 = arith.subf %66, %71 : vector<18x4xf32>
    %73 = arith.mulf %72, %72 : vector<18x4xf32>
    %cst_24 = arith.constant dense<0.000000e+00> : vector<4xf32>
    %74 = vector.multi_reduction <add>, %73, %cst_24 [0] : vector<18x4xf32> to vector<4xf32>
    %75 = vector.shape_cast %74 : vector<4xf32> to vector<1x4xf32>
    %cst_25 = arith.constant 1.800000e+01 : f32
    %76 = vector.broadcast %cst_25 : f32 to vector<1x4xf32>
    %77 = arith.divf %75, %76 : vector<1x4xf32>
    %cst_26 = arith.constant 9.99999974E-6 : f32
    %78 = vector.broadcast %cst_26 : f32 to vector<1x4xf32>
    %79 = arith.addf %77, %78 : vector<1x4xf32>
    %80 = math.rsqrt %79 : vector<1x4xf32>
    %81 = vector.broadcast %80 : vector<1x4xf32> to vector<18x4xf32>
    %82 = arith.mulf %72, %81 : vector<18x4xf32>
    %83 = vector.broadcast %5 : vector<1x4xf32> to vector<18x4xf32>
    %84 = arith.mulf %82, %83 : vector<18x4xf32>
    %85 = vector.broadcast %6 : vector<1x4xf32> to vector<18x4xf32>
    %86 = arith.addf %84, %85 : vector<18x4xf32>
    %cst_27 = arith.constant 0.000000e+00 : f32
    %87 = vector.broadcast %cst_27 : f32 to vector<18x4xf32>
    %88 = arith.maximumf %86, %87 : vector<18x4xf32>
    %cst_28 = arith.constant dense<0.000000e+00> : vector<18x16xf32>
    %89 = tpu.matmul %88, %2, %cst_28 {dimension_numbers = #tpu.dot_dimension_numbers<[1], [0], [0], [1], [0, 0, 1, 1], [], []>} : vector<18x4xf32>, vector<4x16xf32>, vector<18x16xf32> -> vector<18x16xf32>
    %cst_29 = arith.constant dense<0.000000e+00> : vector<16xf32>
    %90 = vector.multi_reduction <add>, %89, %cst_29 [0] : vector<18x16xf32> to vector<16xf32>
    %91 = vector.shape_cast %90 : vector<16xf32> to vector<1x16xf32>
    %cst_30 = arith.constant 5.000000e+01 : f32
    %92 = vector.broadcast %cst_30 : f32 to vector<1x16xf32>
    %93 = arith.divf %91, %92 : vector<1x16xf32>
    %94 = vector.broadcast %93 : vector<1x16xf32> to vector<18x16xf32>
    %95 = arith.subf %89, %94 : vector<18x16xf32>
    %96 = arith.mulf %95, %95 : vector<18x16xf32>
    %cst_31 = arith.constant dense<0.000000e+00> : vector<16xf32>
    %97 = vector.multi_reduction <add>, %96, %cst_31 [0] : vector<18x16xf32> to vector<16xf32>
    %98 = vector.shape_cast %97 : vector<16xf32> to vector<1x16xf32>
    %cst_32 = arith.constant 3.200000e+01 : f32
    %99 = vector.broadcast %cst_32 : f32 to vector<1x16xf32>
    %100 = arith.mulf %99, %93 : vector<1x16xf32>
    %101 = arith.mulf %100, %93 : vector<1x16xf32>
    %102 = arith.addf %98, %101 : vector<1x16xf32>
    %cst_33 = arith.constant 5.000000e+01 : f32
    %103 = vector.broadcast %cst_33 : f32 to vector<1x16xf32>
    %104 = arith.divf %102, %103 : vector<1x16xf32>
    %cst_34 = arith.constant 9.99999974E-6 : f32
    %105 = vector.broadcast %cst_34 : f32 to vector<1x16xf32>
    %106 = arith.addf %104, %105 : vector<1x16xf32>
    %107 = math.rsqrt %106 : vector<1x16xf32>
    %108 = vector.broadcast %107 : vector<1x16xf32> to vector<18x16xf32>
    %109 = arith.mulf %95, %108 : vector<18x16xf32>
    %110 = vector.broadcast %7 : vector<1x16xf32> to vector<18x16xf32>
    %111 = arith.mulf %109, %110 : vector<18x16xf32>
    %112 = vector.broadcast %8 : vector<1x16xf32> to vector<18x16xf32>
    %113 = arith.addf %111, %112 : vector<18x16xf32>
    %114 = arith.mulf %7, %93 : vector<1x16xf32>
    %115 = arith.mulf %114, %107 : vector<1x16xf32>
    %116 = arith.subf %8, %115 : vector<1x16xf32>
    %117 = vector.shape_cast %113 : vector<18x16xf32> to vector<2x3x3x16xf32>
    %118 = vector.shape_cast %9 : vector<2x16xf32> to vector<2x1x1x16xf32>
    %119 = vector.broadcast %118 : vector<2x1x1x16xf32> to vector<2x3x3x16xf32>
    %120 = arith.addf %117, %119 : vector<2x3x3x16xf32>
    %cst_35 = arith.constant 0.000000e+00 : f32
    %121 = vector.broadcast %cst_35 : f32 to vector<2x3x3x16xf32>
    %122 = arith.maximumf %120, %121 : vector<2x3x3x16xf32>
    %123 = vector.broadcast %116 : vector<1x16xf32> to vector<2x16xf32>
    %124 = arith.addf %123, %9 : vector<2x16xf32>
    %cst_36 = arith.constant 0.000000e+00 : f32
    %125 = vector.broadcast %cst_36 : f32 to vector<2x16xf32>
    %126 = arith.maximumf %124, %125 : vector<2x16xf32>
    %127 = vector.shape_cast %126 : vector<2x16xf32> to vector<2x1x1x16xf32>
    %128 = vector.shape_cast %127 : vector<2x1x1x16xf32> to vector<2x1x1x16xf32>
    %129 = vector.broadcast %128 : vector<2x1x1x16xf32> to vector<2x1x3x16xf32>
    %130 = tpu.concatenate %129, %122, %129 in 1 : vector<2x1x3x16xf32>, vector<2x3x3x16xf32>, vector<2x1x3x16xf32> -> vector<2x5x3x16xf32>
    %131 = vector.shape_cast %127 : vector<2x1x1x16xf32> to vector<2x1x1x16xf32>
    %132 = vector.broadcast %131 : vector<2x1x1x16xf32> to vector<2x5x1x16xf32>
    %133 = tpu.concatenate %132, %130, %132 in 2 : vector<2x5x1x16xf32>, vector<2x5x3x16xf32>, vector<2x5x1x16xf32> -> vector<2x5x5x16xf32>
    %c0_37 = arith.constant 0 : index
    %c0_38 = arith.constant 0 : index
    %c0_39 = arith.constant 0 : index
    %c0_40 = arith.constant 0 : index
    %134 = vector.load %arg2[%c0_37, %c0_38, %c0_39, %c0_40] : memref<2x5x5x16xf32, #tpu.memory_space<vmem>>, vector<2x5x5x16xf32>
    tpu.vector_store %arg2[%c0_37, %c0_38, %c0_39, %c0_40], %133 {strides = array<i32>} : memref<2x5x5x16xf32, #tpu.memory_space<vmem>>, vector<2x5x5x16xf32>,
    return
  }
}

</mosaic_0001>

<llo_original>
// kernel: bottleneck_forward.1
$region0: #{bottleneck_forward.1}
  #allocation0 [shape = 'u32[]', space=smem, size = 0x4, offset = 0x4, fixed_abs, tag = 'smem constant byte address 0x4 - core index']
  #allocation1 [shape = 'u32[144,128]{1,0:T(1,128)}', space=vmem, size = 0x12000, scoped, tag = 'internal scratch']
  %s0 = inlined_call_operand.vmem [shape: f32[2,16], index: 0, kind: input, shape index: {}]
  %s1 = inlined_call_operand.vmem [shape: f32[62,16], index: 1, kind: input, shape index: {}]
  %s2 = inlined_call_operand.vmem [shape: f32[2,5,5,16], index: 2, kind: output, shape index: {}]
  %s3 = sld [smem:[#allocation0]]
  $region18: #{bottleneck_forward.1} parent=0
    _
  %s5 = ssub.s32 1, %s3
  %s6 = scalar_select 0, %s5, %s3
  // Predicated region
  $region2: #{bottleneck_forward.1} parent=0 // pred_check
    _
  $region3: #{bottleneck_forward.1} parent=0 // pred_check_branch
    %8 = sbr.rel (0) target = $region5
  $region4: #{bottleneck_forward.1} parent=0 // pred_region
    _
  $region5: #{bottleneck_forward.1} parent=0 // pred_fallthru
    _
  // Predicated region
  $region6: #{bottleneck_forward.1} parent=0 // pred_check
    _
  $region7: #{bottleneck_forward.1} parent=0 // pred_check_branch
    %10 = sbr.rel (0) target = $region9
  $region8: #{bottleneck_forward.1} parent=0 // pred_region
    _
  $region9: #{bottleneck_forward.1} parent=0 // pred_fallthru
    _
  %v11 = vld [vmem:[%s1] sm:$0xff]
  %v12 = vld [vmem:[%s1 + $0x8] sm:$0xff]
  %v13 = vld [vmem:[%s1 + $0x10] sm:$0xff]
  %v14 = vld [vmem:[%s1 + $0x18] sm:$0xff]
  %v15 = vld [vmem:[%s1 + $0x20] sm:$0xff]
  %v16 = vld [vmem:[%s1 + $0x28] sm:$0xff]
  %v17 = vld [vmem:[%s1 + $0x30] sm:$0xf]
  %v18 = vld [vmem:[%s1 + $0x34] sm:$0xf]
  %v19 = vld [vmem:[%s1 + $0x38] sm:$0x1]
  %v20 = vld [vmem:[%s1 + $0x39] sm:$0x1]
  %v21 = vld [vmem:[%s1 + $0x3a] sm:$0x1]
  %v22 = vld [vmem:[%s1 + $0x3b] sm:$0x1]
  %v23 = vld [vmem:[%s1 + $0x3c] sm:$0x1]
  %v24 = vld [vmem:[%s1 + $0x3d] sm:$0x1]
  %v25 = vld [vmem:[%s0] sm:$0x3]
  %vm26 = vcmask 130048
  %v28 = vsel %vm26, %v25, 0
  %30 = vmatprep.subr.mxu0 0.0
  %31 = vmatpush1.msra.mxu0 0.0
  %32 = vmatprep.subr.mxu0 0.0
  %33 = vmatpush1.msra.mxu0 0.0
  %34 = vmatprep.subr.mxu0 0.0
  %35 = vmatpush1.msra.mxu0 0.0
  %36 = vmatprep.subr.mxu0 0.0
  %37 = vmatpush1.msra.mxu0 0.0
  %38 = vmatprep.subr.mxu0 0.0
  %39 = vmatpush1.msra.mxu0 0.0
  %40 = vmatprep.subr.mxu0 0.0
  %41 = vmatpush1.msra.mxu0 0.0
  %42 = vmatprep.subr.mxu0 0.0
  %43 = vmatpush1.msra.mxu0 0.0
  %44 = vmatprep.subr.mxu0 0.0
  %45 = vmatpush1.msra.mxu0 0.0
  %46 = vmatprep.subr.mxu0 0.0
  %47 = vmatpush1.msra.mxu0 0.0
  %48 = vmatprep.subr.mxu0 0.0
  %49 = vmatpush1.msra.mxu0 0.0
  %50 = vmatprep.subr.mxu0 0.0
  %51 = vmatpush1.msra.mxu0 0.0
  %52 = vmatprep.subr.mxu0 0.0
  %53 = vmatpush1.msra.mxu0 0.0
  %54 = vmatprep.subr.mxu0 0.0
  %55 = vmatpush1.msra.mxu0 0.0
  %56 = vmatprep.subr.mxu0 0.0
  %57 = vmatpush1.msra.mxu0 0.0
  %58 = vmatprep.subr.mxu0 0.0
  %59 = vmatpush1.msra.mxu0 %v12
  %60 = vmatprep.subr.mxu0 0.0
  %61 = vmatpush1.msra.mxu0 %v11
  %62 = vmatprep.subr.mxu0 0.0
  %63 = vmatpush2.msra.mxu0 0.0
  %64 = vmatprep.subr.mxu0 0.0
  %65 = vmatpush2.msra.mxu0 0.0
  %66 = vmatprep.subr.mxu0 0.0
  %67 = vmatpush2.msra.mxu0 0.0
  %68 = vmatprep.subr.mxu0 0.0
  %69 = vmatpush2.msra.mxu0 0.0
  %70 = vmatprep.subr.mxu0 0.0
  %71 = vmatpush2.msra.mxu0 0.0
  %72 = vmatprep.subr.mxu0 0.0
  %73 = vmatpush2.msra.mxu0 0.0
  %74 = vmatprep.subr.mxu0 0.0
  %75 = vmatpush2.msra.mxu0 0.0
  %76 = vmatprep.subr.mxu0 0.0
  %77 = vmatpush2.msra.mxu0 0.0
  %78 = vmatprep.subr.mxu0 0.0
  %79 = vmatpush2.msra.mxu0 0.0
  %80 = vmatprep.subr.mxu0 0.0
  %81 = vmatpush2.msra.mxu0 0.0
  %82 = vmatprep.subr.mxu0 0.0
  %83 = vmatpush2.msra.mxu0 0.0
  %84 = vmatprep.subr.mxu0 0.0
  %85 = vmatpush2.msra.mxu0 0.0
  %86 = vmatprep.subr.mxu0 0.0
  %87 = vmatpush2.msra.mxu0 0.0
  %88 = vmatprep.subr.mxu0 0.0
  %89 = vmatpush2.msra.mxu0 0.0
  %90 = vmatprep.subr.mxu0 0.0
  %91 = vmatpush2.msra.mxu0 0.0
  %92 = vmatprep.subr.mxu0 0.0
  %93 = vmatpush2.msra.mxu0 0.0
  %94 = vmatprep.mubr.f32.mxu0 0.0
  %95 = vmatmul.mubr.f32.gmra.mxu0 %v28
  %v96 = vpop.f32.mrf.mxu0
  %v97 = vadd.f32 0.0, %v96
  %v98 = vpop.f32.mrf.mxu0
  %99 = vdwg.mxu0
  %vm100 = vcmask 25600
  %v101 = vsel %vm100, %v97, 0.0
  %v102 = vrot.slane %v101, 4
  %v103 = vadd.f32 %v101, %v102
  %v104 = vrot.slane %v103, 2
  %v105 = vadd.f32 %v103, %v104
  %v106 = vrot.slane %v105, 1
  %v107 = vadd.f32 %v105, %v106
  %v108 = vrcp.pop 18.0
  %v109 = vmul.f32 %v107, %v108
  %v110 = vsub.f32 %v97, %v109
  %v111 = vmul.f32 %v110, %v110
  %v112 = vsel %vm100, %v111, 0.0
  %v113 = vrot.slane %v112, 4
  %v114 = vadd.f32 %v112, %v113
  %v115 = vrot.slane %v114, 2
  %v116 = vadd.f32 %v114, %v115
  %v117 = vrot.slane %v116, 1
  %v118 = vadd.f32 %v116, %v117
  %v119 = vmul.f32 %v109, 16.0
  %v120 = vmul.f32 %v119, %v109
  %v121 = vadd.f32 %v118, %v120
  %v122 = vmul.f32 %v121, %v108
  %v123 = vadd.f32 %v122, 1e-05
  %v124 = vrsqrt.pop %v123
  %v125 = vmul.f32 %v110, %v124
  %v126 = vlaneseq
  %v127 = vshrl.u32 %v126, 7
  %v128 = vsub.s32 0, %v127
  %v129 = vrot.slane %v19, %v128
  %v130 = vmul.f32 %v125, %v129
  %v131 = vlaneseq
  %v132 = vshrl.u32 %v131, 7
  %v133 = vsub.s32 0, %v132
  %v134 = vrot.slane %v20, %v133
  %v135 = vadd.f32 %v130, %v134
  %v136 = vmax.f32 %v135, 0.0
  %v137 = vmul.f32 %v19, %v109
  %v138 = vmul.f32 %v137, %v124
  %v139 = vsub.f32 %v20, %v138
  %v140 = vmax.f32 %v139, 0.0
  %v143 = vunpack.c.l.s4 1966171168
  %v144 = vunpack.c.0.s8 %v143
  %v145 = vlaneseq
  %v146 = vshrl.u32 %v145, 7
  %v147 = vsub.s32 %v144, %v146
  %v148 = vrot.slane %v136, %v147
  %v149 = vcombine.high %v148, %v148
  %v151 = vunpack.c.l.s4 1966171168
  %v152 = vunpack.c.0.s8 %v151
  %v153 = vlaneseq
  %v154 = vshrl.u32 %v153, 7
  %v155 = vsub.s32 %v152, %v154
  %v156 = vrot.slane %v148, %v155
  %v158 = vunpack.c.l.s4 1966171168
  %v159 = vunpack.c.0.s8 %v158
  %v160 = vlaneseq
  %v161 = vshrl.u32 %v160, 7
  %v162 = vsub.s32 %v159, %v161
  %v163 = vrot.slane %v149, %v162
  %v164 = vlaneseq
  %v165 = vshrl.u32 %v164, 7
  %v166 = vsub.s32 0, %v165
  %v167 = vrot.slane %v156, %v166
  %v168 = vlaneseq
  %v169 = vshrl.u32 %v168, 7
  %v170 = vsub.s32 0, %v169
  %v171 = vrot.slane %v163, %v170
  %v175 = vrot.slane %v140, 6
  %vm177 = vcmask 1040384
  %v178 = vsel %vm177, %v140, %v167
  %v179 = vsel %vm177, %v140, %v171
  %vm180 = vcmask 1041408
  %v181 = vsel %vm180, %v178, %v175
  %v182 = vsel %vm180, %v179, %v175
  %v183 = vlaneseq
  %v184 = vshrl.u32 %v183, 7
  %v185 = vsub.s32 0, %v184
  %v186 = vrot.slane %v140, %v185
  %v191 = vrot.slane 0.0, 7
  %v192 = vrot.slane %v186, 7
  %v193 = vrot.slane %v181, 7
  %v194 = vrot.slane %v182, 7
  %v199 = vsel %vm177, 0.0, %v191
  %v200 = vsel %vm177, 0.0, %v192
  %v201 = vsel %vm177, 0.0, %v193
  %v202 = vsel %vm177, 0.0, %v194
  %vm203 = vcmask 1043456
  %v204 = vsel %vm203, %v199, 0.0
  %v205 = vsel %vm203, %v200, 0.0
  %v206 = vsel %vm203, %v201, 0.0
  %v207 = vsel %vm203, %v202, 0.0
  %v212 = vrot.slane %v204, 1
  %v213 = vrot.slane %v205, 1
  %v214 = vrot.slane %v206, 1
  %v215 = vrot.slane %v207, 1
  %216 = vrot.lane.b32.xlu0 %v212, 4
  %v217 = vpop.permute.xlu0 %216
  %218 = vrot.lane.b32.xlu0 %v213, 4
  %v219 = vpop.permute.xlu0 %218
  %220 = vrot.lane.b32.xlu0 %v214, 4
  %v221 = vpop.permute.xlu0 %220
  %222 = vrot.lane.b32.xlu0 %v215, 4
  %v223 = vpop.permute.xlu0 %222
  %v228 = vrot.slane %v204, 2
  %v229 = vrot.slane %v205, 2
  %v230 = vrot.slane %v206, 2
  %v231 = vrot.slane %v207, 2
  %232 = vrot.lane.b32.xlu0 %v228, 8
  %v233 = vpop.permute.xlu0 %232
  %234 = vrot.lane.b32.xlu0 %v229, 8
  %v235 = vpop.permute.xlu0 %234
  %236 = vrot.lane.b32.xlu0 %v230, 8
  %v237 = vpop.permute.xlu0 %236
  %238 = vrot.lane.b32.xlu0 %v231, 8
  %v239 = vpop.permute.xlu0 %238
  %244 = vrot.lane.b32.xlu0 %v205, 12
  %v245 = vpop.permute.xlu0 %244
  %246 = vrot.lane.b32.xlu0 %v206, 12
  %v247 = vpop.permute.xlu0 %246
  %248 = vrot.lane.b32.xlu0 %v207, 12
  %v249 = vpop.permute.xlu0 %248
  %253 = vrot.lane.b32.xlu0 %v213, 16
  %v254 = vpop.permute.xlu0 %253
  %255 = vrot.lane.b32.xlu0 %v214, 16
  %v256 = vpop.permute.xlu0 %255
  %257 = vrot.lane.b32.xlu0 %v215, 16
  %v258 = vpop.permute.xlu0 %257
  %262 = vrot.lane.b32.xlu0 %v229, 20
  %v263 = vpop.permute.xlu0 %262
  %264 = vrot.lane.b32.xlu0 %v230, 20
  %v265 = vpop.permute.xlu0 %264
  %266 = vrot.lane.b32.xlu0 %v231, 20
  %v267 = vpop.permute.xlu0 %266
  %271 = vrot.lane.b32.xlu0 %v206, 24
  %v272 = vpop.permute.xlu0 %271
  %273 = vrot.lane.b32.xlu0 %v205, 24
  %v274 = vpop.permute.xlu0 %273
  %275 = vrot.lane.b32.xlu0 %v204, 24
  %v276 = vpop.permute.xlu0 %275
  %277 = vrot.lane.b32.xlu0 %v207, 24
  %v278 = vpop.permute.xlu0 %277
  %283 = vrot.lane.b32.xlu0 %v214, 28
  %v284 = vpop.permute.xlu0 %283
  %285 = vrot.lane.b32.xlu0 %v213, 28
  %v286 = vpop.permute.xlu0 %285
  %287 = vrot.lane.b32.xlu0 %v212, 28
  %v288 = vpop.permute.xlu0 %287
  %289 = vrot.lane.b32.xlu0 %v215, 28
  %v290 = vpop.permute.xlu0 %289
  %295 = vrot.lane.b32.xlu0 %v230, 32
  %v296 = vpop.permute.xlu0 %295
  %297 = vrot.lane.b32.xlu0 %v229, 32
  %v298 = vpop.permute.xlu0 %297
  %299 = vrot.lane.b32.xlu0 %v228, 32
  %v300 = vpop.permute.xlu0 %299
  %301 = vrot.lane.b32.xlu0 %v231, 32
  %v302 = vpop.permute.xlu0 %301
  %vm307 = vcmask 31744
  %v308 = vsel %vm307, %v204, %v217
  %v309 = vsel %vm307, %v205, %v219
  %v310 = vsel %vm307, %v206, %v221
  %v311 = vsel %vm307, %v207, %v223
  %vm312 = vcmask 64512
  %v313 = vsel %vm312, %v308, %v233
  %v314 = vsel %vm312, %v309, %v235
  %v315 = vsel %vm312, %v310, %v237
  %v316 = vsel %vm312, %v311, %v239
  %vm317 = vcmask 97280
  %v318 = vsel %vm317, %v313, %v245
  %v319 = vsel %vm317, %v314, %v247
  %v320 = vsel %vm317, %v315, %v245
  %v321 = vsel %vm317, %v314, %v249
  %v322 = vsel %vm317, %v316, %v245
  %v323 = vsel %vm26, %v318, %v254
  %v324 = vsel %vm26, %v319, %v256
  %v325 = vsel %vm26, %v320, %v254
  %v326 = vsel %vm26, %v321, %v258
  %v327 = vsel %vm26, %v322, %v254
  %vm328 = vcmask 162816
  %v329 = vsel %vm328, %v323, %v263
  %v330 = vsel %vm328, %v324, %v265
  %v331 = vsel %vm328, %v325, %v263
  %v332 = vsel %vm328, %v326, %v267
  %v333 = vsel %vm328, %v327, %v263
  %vm334 = vcmask 195584
  %v335 = vsel %vm334, %v329, %v272
  %v336 = vsel %vm334, %v330, %v274
  %v337 = vsel %vm334, %v331, %v276
  %v338 = vsel %vm334, %v329, %v278
  %v339 = vsel %vm334, %v332, %v274
  %v340 = vsel %vm334, %v333, %v276
  %vm341 = vcmask 228352
  %v342 = vsel %vm341, %v335, %v284
  %v343 = vsel %vm341, %v336, %v286
  %v344 = vsel %vm341, %v337, %v288
  %v345 = vsel %vm341, %v338, %v290
  %v346 = vsel %vm341, %v339, %v286
  %v347 = vsel %vm341, %v340, %v288
  %vm348 = vcmask 261120
  %v349 = vsel %vm348, %v342, %v296
  %v350 = vsel %vm348, %v343, %v298
  %v351 = vsel %vm348, %v344, %v300
  %v352 = vsel %vm348, %v345, %v302
  %v353 = vsel %vm348, %v346, %v298
  %v354 = vsel %vm348, %v347, %v300
  %v362 = vunpack.c.l.s4 1966171168
  %v363 = vunpack.c.0.s8 %v362
  %v364 = vlaneseq
  %v365 = vshrl.u32 %v364, 7
  %v366 = vsub.s32 %v363, %v365
  %v367 = vrot.slane %v349, %v366
  %v368 = vcombine.high %v367, %v367
  %v370 = vunpack.c.l.s4 1966171168
  %v371 = vunpack.c.0.s8 %v370
  %v372 = vlaneseq
  %v373 = vshrl.u32 %v372, 7
  %v374 = vsub.s32 %v371, %v373
  %v375 = vrot.slane %v367, %v374
  %v377 = vunpack.c.l.s4 1966171168
  %v378 = vunpack.c.0.s8 %v377
  %v379 = vlaneseq
  %v380 = vshrl.u32 %v379, 7
  %v381 = vsub.s32 %v378, %v380
  %v382 = vrot.slane %v368, %v381
  %v383 = vcombine.high %v375, %v375
  %v385 = vunpack.c.l.s4 1966171168
  %v386 = vunpack.c.0.s8 %v385
  %v387 = vlaneseq
  %v388 = vshrl.u32 %v387, 7
  %v389 = vsub.s32 %v386, %v388
  %v390 = vrot.slane %v350, %v389
  %v391 = vcombine.high %v390, %v390
  %v393 = vunpack.c.l.s4 1966171168
  %v394 = vunpack.c.0.s8 %v393
  %v395 = vlaneseq
  %v396 = vshrl.u32 %v395, 7
  %v397 = vsub.s32 %v394, %v396
  %v398 = vrot.slane %v390, %v397
  %v400 = vunpack.c.l.s4 1966171168
  %v401 = vunpack.c.0.s8 %v400
  %v402 = vlaneseq
  %v403 = vshrl.u32 %v402, 7
  %v404 = vsub.s32 %v401, %v403
  %v405 = vrot.slane %v391, %v404
  %v406 = vcombine.high %v398, %v398
  %v408 = vunpack.c.l.s4 1966171168
  %v409 = vunpack.c.0.s8 %v408
  %v410 = vlaneseq
  %v411 = vshrl.u32 %v410, 7
  %v412 = vsub.s32 %v409, %v411
  %v413 = vrot.slane %v351, %v412
  %v414 = vcombine.high %v413, %v413
  %v416 = vunpack.c.l.s4 1966171168
  %v417 = vunpack.c.0.s8 %v416
  %v418 = vlaneseq
  %v419 = vshrl.u32 %v418, 7
  %v420 = vsub.s32 %v417, %v419
  %v421 = vrot.slane %v413, %v420
  %v423 = vunpack.c.l.s4 1966171168
  %v424 = vunpack.c.0.s8 %v423
  %v425 = vlaneseq
  %v426 = vshrl.u32 %v425, 7
  %v427 = vsub.s32 %v424, %v426
  %v428 = vrot.slane %v414, %v427
  %v429 = vcombine.high %v421, %v421
  %v431 = vunpack.c.l.s4 1966171168
  %v432 = vunpack.c.0.s8 %v431
  %v433 = vlaneseq
  %v434 = vshrl.u32 %v433, 7
  %v435 = vsub.s32 %v432, %v434
  %v436 = vrot.slane %v352, %v435
  %v437 = vcombine.high %v436, %v436
  %v439 = vunpack.c.l.s4 1966171168
  %v440 = vunpack.c.0.s8 %v439
  %v441 = vlaneseq
  %v442 = vshrl.u32 %v441, 7
  %v443 = vsub.s32 %v440, %v442
  %v444 = vrot.slane %v436, %v443
  %v446 = vunpack.c.l.s4 1966171168
  %v447 = vunpack.c.0.s8 %v446
  %v448 = vlaneseq
  %v449 = vshrl.u32 %v448, 7
  %v450 = vsub.s32 %v447, %v449
  %v451 = vrot.slane %v437, %v450
  %v452 = vcombine.high %v444, %v444
  %v454 = vunpack.c.l.s4 1966171168
  %v455 = vunpack.c.0.s8 %v454
  %v456 = vlaneseq
  %v457 = vshrl.u32 %v456, 7
  %v458 = vsub.s32 %v455, %v457
  %v459 = vrot.slane %v353, %v458
  %v460 = vcombine.high %v459, %v459
  %v462 = vunpack.c.l.s4 1966171168
  %v463 = vunpack.c.0.s8 %v462
  %v464 = vlaneseq
  %v465 = vshrl.u32 %v464, 7
  %v466 = vsub.s32 %v463, %v465
  %v467 = vrot.slane %v459, %v466
  %v469 = vunpack.c.l.s4 1966171168
  %v470 = vunpack.c.0.s8 %v469
  %v471 = vlaneseq
  %v472 = vshrl.u32 %v471, 7
  %v473 = vsub.s32 %v470, %v472
  %v474 = vrot.slane %v460, %v473
  %v475 = vcombine.high %v467, %v467
  %v477 = vunpack.c.l.s4 1966171168
  %v478 = vunpack.c.0.s8 %v477
  %v479 = vlaneseq
  %v480 = vshrl.u32 %v479, 7
  %v481 = vsub.s32 %v478, %v480
  %v482 = vrot.slane %v354, %v481
  %v483 = vcombine.high %v482, %v482
  %v485 = vunpack.c.l.s4 1966171168
  %v486 = vunpack.c.0.s8 %v485
  %v487 = vlaneseq
  %v488 = vshrl.u32 %v487, 7
  %v489 = vsub.s32 %v486, %v488
  %v490 = vrot.slane %v482, %v489
  %v492 = vunpack.c.l.s4 1966171168
  %v493 = vunpack.c.0.s8 %v492
  %v494 = vlaneseq
  %v495 = vshrl.u32 %v494, 7
  %v496 = vsub.s32 %v493, %v495
  %v497 = vrot.slane %v483, %v496
  %v498 = vcombine.high %v490, %v490
  %v499 = vcombine.low %v375, %v382
  %v500 = vcombine.low %v383, %v398
  %v501 = vcombine.low %v405, %v406
  %v502 = vcombine.low %v421, %v428
  %v504 = vunpack.c.l.s4 1966171168
  %v505 = vunpack.c.0.s8 %v504
  %v506 = vlaneseq
  %v507 = vshrl.u32 %v506, 7
  %v508 = vsub.s32 %v505, %v507
  %v509 = vrot.slane %v499, %v508
  %v511 = vunpack.c.l.s4 1966171168
  %v512 = vunpack.c.0.s8 %v511
  %v513 = vlaneseq
  %v514 = vshrl.u32 %v513, 7
  %v515 = vsub.s32 %v512, %v514
  %v516 = vrot.slane %v500, %v515
  %v518 = vunpack.c.l.s4 1966171168
  %v519 = vunpack.c.0.s8 %v518
  %v520 = vlaneseq
  %v521 = vshrl.u32 %v520, 7
  %v522 = vsub.s32 %v519, %v521
  %v523 = vrot.slane %v501, %v522
  %v525 = vunpack.c.l.s4 1966171168
  %v526 = vunpack.c.0.s8 %v525
  %v527 = vlaneseq
  %v528 = vshrl.u32 %v527, 7
  %v529 = vsub.s32 %v526, %v528
  %v530 = vrot.slane %v502, %v529
  %v531 = vcombine.low %v509, %v516
  %v532 = vcombine.low %v523, %v530
  %v534 = vunpack.c.l.s4 1966171168
  %v535 = vunpack.c.0.s8 %v534
  %v536 = vlaneseq
  %v537 = vshrl.u32 %v536, 7
  %v538 = vsub.s32 %v535, %v537
  %v539 = vrot.slane %v531, %v538
  %v541 = vunpack.c.l.s4 1966171168
  %v542 = vunpack.c.0.s8 %v541
  %v543 = vlaneseq
  %v544 = vshrl.u32 %v543, 7
  %v545 = vsub.s32 %v542, %v544
  %v546 = vrot.slane %v532, %v545
  %v547 = vcombine.low %v539, %v546
  %v548 = vcombine.low %v429, %v444
  %v549 = vcombine.low %v451, %v452
  %v550 = vcombine.low %v467, %v474
  %v551 = vcombine.low %v475, %v490
  %v553 = vunpack.c.l.s4 1966171168
  %v554 = vunpack.c.0.s8 %v553
  %v555 = vlaneseq
  %v556 = vshrl.u32 %v555, 7
  %v557 = vsub.s32 %v554, %v556
  %v558 = vrot.slane %v548, %v557
  %v560 = vunpack.c.l.s4 1966171168
  %v561 = vunpack.c.0.s8 %v560
  %v562 = vlaneseq
  %v563 = vshrl.u32 %v562, 7
  %v564 = vsub.s32 %v561, %v563
  %v565 = vrot.slane %v549, %v564
  %v567 = vunpack.c.l.s4 1966171168
  %v568 = vunpack.c.0.s8 %v567
  %v569 = vlaneseq
  %v570 = vshrl.u32 %v569, 7
  %v571 = vsub.s32 %v568, %v570
  %v572 = vrot.slane %v550, %v571
  %v574 = vunpack.c.l.s4 1966171168
  %v575 = vunpack.c.0.s8 %v574
  %v576 = vlaneseq
  %v577 = vshrl.u32 %v576, 7
  %v578 = vsub.s32 %v575, %v577
  %v579 = vrot.slane %v551, %v578
  %v580 = vcombine.low %v558, %v565
  %v581 = vcombine.low %v572, %v579
  %v583 = vunpack.c.l.s4 1966171168
  %v584 = vunpack.c.0.s8 %v583
  %v585 = vlaneseq
  %v586 = vshrl.u32 %v585, 7
  %v587 = vsub.s32 %v584, %v586
  %v588 = vrot.slane %v580, %v587
  %v590 = vunpack.c.l.s4 1966171168
  %v591 = vunpack.c.0.s8 %v590
  %v592 = vlaneseq
  %v593 = vshrl.u32 %v592, 7
  %v594 = vsub.s32 %v591, %v593
  %v595 = vrot.slane %v581, %v594
  %v596 = vcombine.low %v588, %v595
  %v597 = vcombine.low %v497, %v498
  %v599 = vunpack.c.l.s4 1966171168
  %v600 = vunpack.c.0.s8 %v599
  %v601 = vlaneseq
  %v602 = vshrl.u32 %v601, 7
  %v603 = vsub.s32 %v600, %v602
  %v604 = vrot.slane %v597, %v603
  %v606 = vunpack.c.l.s4 1966171168
  %v607 = vunpack.c.0.s8 %v606
  %v608 = vlaneseq
  %v609 = vshrl.u32 %v608, 7
  %v610 = vsub.s32 %v607, %v609
  %v611 = vrot.slane %v604, %v610
  %vm612 = vcmask 293888
  %v613 = vsel %vm612, %v547, 0
  %v615 = vsel %vm612, %v596, 0
  %v617 = vsel %vm612, %v611, 0
  %v620 = vsel %vm203, %v17, 0
  %622 = vmatprep.subr.mxu0 0.0
  %623 = vmatpush1.msra.mxu0 0.0
  %624 = vmatprep.subr.mxu0 0.0
  %625 = vmatpush1.msra.mxu0 0.0
  %626 = vmatprep.subr.mxu0 0.0
  %627 = vmatpush1.msra.mxu0 0.0
  %628 = vmatprep.subr.mxu0 0.0
  %629 = vmatpush1.msra.mxu0 0.0
  %630 = vmatprep.subr.mxu0 0.0
  %631 = vmatpush1.msra.mxu0 0.0
  %632 = vmatprep.subr.mxu0 0.0
  %633 = vmatpush1.msra.mxu0 0.0
  %634 = vmatprep.subr.mxu0 0.0
  %635 = vmatpush1.msra.mxu0 0.0
  %636 = vmatprep.subr.mxu0 0.0
  %637 = vmatpush1.msra.mxu0 0.0
  %638 = vmatprep.subr.mxu0 0.0
  %639 = vmatpush1.msra.mxu0 0.0
  %640 = vmatprep.subr.mxu0 0.0
  %641 = vmatpush1.msra.mxu0 0.0
  %642 = vmatprep.subr.mxu0 0.0
  %643 = vmatpush1.msra.mxu0 0.0
  %644 = vmatprep.subr.mxu0 0.0
  %645 = vmatpush1.msra.mxu0 %v620
  %646 = vmatprep.subr.mxu0 0.0
  %647 = vmatpush1.msra.mxu0 %v16
  %648 = vmatprep.subr.mxu0 0.0
  %649 = vmatpush1.msra.mxu0 %v15
  %650 = vmatprep.subr.mxu0 0.0
  %651 = vmatpush1.msra.mxu0 %v14
  %652 = vmatprep.subr.mxu0 0.0
  %653 = vmatpush1.msra.mxu0 %v13
  %654 = vmatprep.subr.mxu0 0.0
  %655 = vmatpush2.msra.mxu0 0.0
  %656 = vmatprep.subr.mxu0 0.0
  %657 = vmatpush2.msra.mxu0 0.0
  %658 = vmatprep.subr.mxu0 0.0
  %659 = vmatpush2.msra.mxu0 0.0
  %660 = vmatprep.subr.mxu0 0.0
  %661 = vmatpush2.msra.mxu0 0.0
  %662 = vmatprep.subr.mxu0 0.0
  %663 = vmatpush2.msra.mxu0 0.0
  %664 = vmatprep.subr.mxu0 0.0
  %665 = vmatpush2.msra.mxu0 0.0
  %666 = vmatprep.subr.mxu0 0.0
  %667 = vmatpush2.msra.mxu0 0.0
  %668 = vmatprep.subr.mxu0 0.0
  %669 = vmatpush2.msra.mxu0 0.0
  %670 = vmatprep.subr.mxu0 0.0
  %671 = vmatpush2.msra.mxu0 0.0
  %672 = vmatprep.subr.mxu0 0.0
  %673 = vmatpush2.msra.mxu0 0.0
  %674 = vmatprep.subr.mxu0 0.0
  %675 = vmatpush2.msra.mxu0 0.0
  %676 = vmatprep.subr.mxu0 0.0
  %677 = vmatpush2.msra.mxu0 0.0
  %678 = vmatprep.subr.mxu0 0.0
  %679 = vmatpush2.msra.mxu0 0.0
  %680 = vmatprep.subr.mxu0 0.0
  %681 = vmatpush2.msra.mxu0 0.0
  %682 = vmatprep.subr.mxu0 0.0
  %683 = vmatpush2.msra.mxu0 0.0
  %684 = vmatprep.subr.mxu0 0.0
  %685 = vmatpush2.msra.mxu0 0.0
  %686 = vmatprep.mubr.f32.mxu0 0.0
  %687 = vmatmul.mubr.f32.gmra.mxu0 %v613
  %v688 = vpop.f32.mrf.mxu0
  %v689 = vadd.f32 0.0, %v688
  %v690 = vpop.f32.mrf.mxu0
  %691 = vmatprep.mubr.f32.mxu0 0.0
  %692 = vmatmul.mubr.f32.gmra.mxu0 %v615
  %v693 = vpop.f32.mrf.mxu0
  %v694 = vadd.f32 0.0, %v693
  %v695 = vpop.f32.mrf.mxu0
  %696 = vmatprep.mubr.f32.mxu0 0.0
  %697 = vmatmul.mubr.f32.gmra.mxu0 %v617
  %v698 = vpop.f32.mrf.mxu0
  %v699 = vadd.f32 0.0, %v698
  %v700 = vpop.f32.mrf.mxu0
  %701 = vdwg.mxu0
  %v702 = vsel %vm307, %v689, 0.0
  %v703 = vsel %vm307, %v694, 0.0
  %v704 = vadd.f32 %v702, %v703
  %v705 = vsel %vm100, %v699, 0.0
  %v706 = vadd.f32 %v704, %v705
  %v707 = vrot.slane %v706, 4
  %v708 = vadd.f32 %v706, %v707
  %v709 = vrot.slane %v708, 2
  %v710 = vadd.f32 %v708, %v709
  %v711 = vrot.slane %v710, 1
  %v712 = vadd.f32 %v710, %v711
  %v713 = vmul.f32 %v712, %v108
  %v714 = vsub.f32 %v689, %v713
  %v715 = vsub.f32 %v694, %v713
  %v716 = vsub.f32 %v699, %v713
  %v717 = vmul.f32 %v714, %v714
  %v718 = vmul.f32 %v715, %v715
  %v719 = vmul.f32 %v716, %v716
  %v720 = vsel %vm307, %v717, 0.0
  %v721 = vsel %vm307, %v718, 0.0
  %v722 = vadd.f32 %v720, %v721
  %v723 = vsel %vm100, %v719, 0.0
  %v724 = vadd.f32 %v722, %v723
  %v725 = vrot.slane %v724, 4
  %v726 = vadd.f32 %v724, %v725
  %v727 = vrot.slane %v726, 2
  %v728 = vadd.f32 %v726, %v727
  %v729 = vrot.slane %v728, 1
  %v730 = vadd.f32 %v728, %v729
  %v731 = vmul.f32 %v730, %v108
  %v732 = vadd.f32 %v731, 1e-05
  %v733 = vrsqrt.pop %v732
  %v734 = vmul.f32 %v714, %v733
  %v735 = vmul.f32 %v715, %v733
  %v736 = vmul.f32 %v716, %v733
  %v737 = vlaneseq
  %v738 = vshrl.u32 %v737, 7
  %v739 = vsub.s32 0, %v738
  %v740 = vrot.slane %v21, %v739
  %v741 = vmul.f32 %v734, %v740
  %v742 = vmul.f32 %v735, %v740
  %v743 = vmul.f32 %v736, %v740
  %v744 = vlaneseq
  %v745 = vshrl.u32 %v744, 7
  %v746 = vsub.s32 0, %v745
  %v747 = vrot.slane %v22, %v746
  %v748 = vadd.f32 %v741, %v747
  %v749 = vadd.f32 %v742, %v747
  %v750 = vadd.f32 %v743, %v747
  %v751 = vmax.f32 %v748, 0.0
  %v752 = vmax.f32 %v749, 0.0
  %v753 = vmax.f32 %v750, 0.0
  %v755 = vsel %vm307, %v751, 0
  %v758 = vsel %vm307, %v752, 0
  %v761 = vsel %vm307, %v753, 0
  %v764 = vsel %vm203, %v18, 0
  %766 = vmatprep.subr.mxu0 0.0
  %767 = vmatpush1.msra.mxu0 0.0
  %768 = vmatprep.subr.mxu0 0.0
  %769 = vmatpush1.msra.mxu0 0.0
  %770 = vmatprep.subr.mxu0 0.0
  %771 = vmatpush1.msra.mxu0 0.0
  %772 = vmatprep.subr.mxu0 0.0
  %773 = vmatpush1.msra.mxu0 0.0
  %774 = vmatprep.subr.mxu0 0.0
  %775 = vmatpush1.msra.mxu0 0.0
  %776 = vmatprep.subr.mxu0 0.0
  %777 = vmatpush1.msra.mxu0 0.0
  %778 = vmatprep.subr.mxu0 0.0
  %779 = vmatpush1.msra.mxu0 0.0
  %780 = vmatprep.subr.mxu0 0.0
  %781 = vmatpush1.msra.mxu0 0.0
  %782 = vmatprep.subr.mxu0 0.0
  %783 = vmatpush1.msra.mxu0 0.0
  %784 = vmatprep.subr.mxu0 0.0
  %785 = vmatpush1.msra.mxu0 0.0
  %786 = vmatprep.subr.mxu0 0.0
  %787 = vmatpush1.msra.mxu0 0.0
  %788 = vmatprep.subr.mxu0 0.0
  %789 = vmatpush1.msra.mxu0 0.0
  %790 = vmatprep.subr.mxu0 0.0
  %791 = vmatpush1.msra.mxu0 0.0
  %792 = vmatprep.subr.mxu0 0.0
  %793 = vmatpush1.msra.mxu0 0.0
  %794 = vmatprep.subr.mxu0 0.0
  %795 = vmatpush1.msra.mxu0 0.0
  %796 = vmatprep.subr.mxu0 0.0
  %797 = vmatpush1.msra.mxu0 %v764
  %798 = vmatprep.subr.mxu0 0.0
  %799 = vmatpush2.msra.mxu0 0.0
  %800 = vmatprep.subr.mxu0 0.0
  %801 = vmatpush2.msra.mxu0 0.0
  %802 = vmatprep.subr.mxu0 0.0
  %803 = vmatpush2.msra.mxu0 0.0
  %804 = vmatprep.subr.mxu0 0.0
  %805 = vmatpush2.msra.mxu0 0.0
  %806 = vmatprep.subr.mxu0 0.0
  %807 = vmatpush2.msra.mxu0 0.0
  %808 = vmatprep.subr.mxu0 0.0
  %809 = vmatpush2.msra.mxu0 0.0
  %810 = vmatprep.subr.mxu0 0.0
  %811 = vmatpush2.msra.mxu0 0.0
  %812 = vmatprep.subr.mxu0 0.0
  %813 = vmatpush2.msra.mxu0 0.0
  %814 = vmatprep.subr.mxu0 0.0
  %815 = vmatpush2.msra.mxu0 0.0
  %816 = vmatprep.subr.mxu0 0.0
  %817 = vmatpush2.msra.mxu0 0.0
  %818 = vmatprep.subr.mxu0 0.0
  %819 = vmatpush2.msra.mxu0 0.0
  %820 = vmatprep.subr.mxu0 0.0
  %821 = vmatpush2.msra.mxu0 0.0
  %822 = vmatprep.subr.mxu0 0.0
  %823 = vmatpush2.msra.mxu0 0.0
  %824 = vmatprep.subr.mxu0 0.0
  %825 = vmatpush2.msra.mxu0 0.0
  %826 = vmatprep.subr.mxu0 0.0
  %827 = vmatpush2.msra.mxu0 0.0
  %828 = vmatprep.subr.mxu0 0.0
  %829 = vmatpush2.msra.mxu0 0.0
  %830 = vmatprep.mubr.f32.mxu0 0.0
  %831 = vmatmul.mubr.f32.gmra.mxu0 %v755
  %v832 = vpop.f32.mrf.mxu0
  %v833 = vadd.f32 0.0, %v832
  %v834 = vpop.f32.mrf.mxu0
  %835 = vmatprep.mubr.f32.mxu0 0.0
  %836 = vmatmul.mubr.f32.gmra.mxu0 %v758
  %v837 = vpop.f32.mrf.mxu0
  %v838 = vadd.f32 0.0, %v837
  %v839 = vpop.f32.mrf.mxu0
  %840 = vmatprep.mubr.f32.mxu0 0.0
  %841 = vmatmul.mubr.f32.gmra.mxu0 %v761
  %v842 = vpop.f32.mrf.mxu0
  %v843 = vadd.f32 0.0, %v842
  %v844 = vpop.f32.mrf.mxu0
  %845 = vdwg.mxu0
  %v846 = vsel %vm26, %v833, 0.0
  %v847 = vsel %vm26, %v838, 0.0
  %v848 = vadd.f32 %v846, %v847
  %vm849 = vcmask 123904
  %v850 = vsel %vm849, %v843, 0.0
  %v851 = vadd.f32 %v848, %v850
  %v852 = vrot.slane %v851, 4
  %v853 = vadd.f32 %v851, %v852
  %v854 = vrot.slane %v853, 2
  %v855 = vadd.f32 %v853, %v854
  %v856 = vrot.slane %v855, 1
  %v857 = vadd.f32 %v855, %v856
  %v858 = vrcp.pop 50.0
  %v859 = vmul.f32 %v857, %v858
  %v860 = vsub.f32 %v833, %v859
  %v861 = vsub.f32 %v838, %v859
  %v862 = vsub.f32 %v843, %v859
  %v863 = vmul.f32 %v860, %v860
  %v864 = vmul.f32 %v861, %v861
  %v865 = vmul.f32 %v862, %v862
  %v866 = vsel %vm26, %v863, 0.0
  %v867 = vsel %vm26, %v864, 0.0
  %v868 = vadd.f32 %v866, %v867
  %v869 = vsel %vm849, %v865, 0.0
  %v870 = vadd.f32 %v868, %v869
  %v871 = vrot.slane %v870, 4
  %v872 = vadd.f32 %v870, %v871
  %v873 = vrot.slane %v872, 2
  %v874 = vadd.f32 %v872, %v873
  %v875 = vrot.slane %v874, 1
  %v876 = vadd.f32 %v874, %v875
  %v877 = vmul.f32 %v859, 32.0
  %v878 = vmul.f32 %v877, %v859
  %v879 = vadd.f32 %v876, %v878
  %v880 = vmul.f32 %v879, %v858
  %v881 = vadd.f32 %v880, 1e-05
  %v882 = vrsqrt.pop %v881
  %v883 = vmul.f32 %v860, %v882
  %v884 = vmul.f32 %v861, %v882
  %v885 = vmul.f32 %v862, %v882
  %v886 = vlaneseq
  %v887 = vshrl.u32 %v886, 7
  %v888 = vsub.s32 0, %v887
  %v889 = vrot.slane %v23, %v888
  %v890 = vmul.f32 %v883, %v889
  %v891 = vmul.f32 %v884, %v889
  %v892 = vmul.f32 %v885, %v889
  %v893 = vlaneseq
  %v894 = vshrl.u32 %v893, 7
  %v895 = vsub.s32 0, %v894
  %v896 = vrot.slane %v24, %v895
  %v897 = vadd.f32 %v890, %v896
  %v898 = vadd.f32 %v891, %v896
  %v899 = vadd.f32 %v892, %v896
  %v900 = vmul.f32 %v23, %v859
  %v901 = vmul.f32 %v900, %v882
  %v902 = vsub.f32 %v24, %v901
  %v906 = vcombine.high %v897, %v897
  %v908 = vunpack.c.l.s4 1966171168
  %v909 = vunpack.c.0.s8 %v908
  %v910 = vlaneseq
  %v911 = vshrl.u32 %v910, 7
  %v912 = vsub.s32 %v909, %v911
  %v913 = vrot.slane %v897, %v912
  %v915 = vunpack.c.l.s4 1966171168
  %v916 = vunpack.c.0.s8 %v915
  %v917 = vlaneseq
  %v918 = vshrl.u32 %v917, 7
  %v919 = vsub.s32 %v916, %v918
  %v920 = vrot.slane %v906, %v919
  %v921 = vcombine.high %v913, %v913
  %v922 = vcombine.high %v920, %v920
  %v924 = vunpack.c.l.s4 1966171168
  %v925 = vunpack.c.0.s8 %v924
  %v926 = vlaneseq
  %v927 = vshrl.u32 %v926, 7
  %v928 = vsub.s32 %v925, %v927
  %v929 = vrot.slane %v913, %v928
  %v931 = vunpack.c.l.s4 1966171168
  %v932 = vunpack.c.0.s8 %v931
  %v933 = vlaneseq
  %v934 = vshrl.u32 %v933, 7
  %v935 = vsub.s32 %v932, %v934
  %v936 = vrot.slane %v920, %v935
  %v938 = vunpack.c.l.s4 1966171168
  %v939 = vunpack.c.0.s8 %v938
  %v940 = vlaneseq
  %v941 = vshrl.u32 %v940, 7
  %v942 = vsub.s32 %v939, %v941
  %v943 = vrot.slane %v921, %v942
  %v945 = vunpack.c.l.s4 1966171168
  %v946 = vunpack.c.0.s8 %v945
  %v947 = vlaneseq
  %v948 = vshrl.u32 %v947, 7
  %v949 = vsub.s32 %v946, %v948
  %v950 = vrot.slane %v922, %v949
  %v951 = vcombine.high %v929, %v929
  %v952 = vcombine.high %v936, %v936
  %v953 = vcombine.high %v943, %v943
  %v954 = vcombine.high %v950, %v950
  %v955 = vcombine.high %v898, %v898
  %v957 = vunpack.c.l.s4 1966171168
  %v958 = vunpack.c.0.s8 %v957
  %v959 = vlaneseq
  %v960 = vshrl.u32 %v959, 7
  %v961 = vsub.s32 %v958, %v960
  %v962 = vrot.slane %v898, %v961
  %v964 = vunpack.c.l.s4 1966171168
  %v965 = vunpack.c.0.s8 %v964
  %v966 = vlaneseq
  %v967 = vshrl.u32 %v966, 7
  %v968 = vsub.s32 %v965, %v967
  %v969 = vrot.slane %v955, %v968
  %v970 = vcombine.high %v962, %v962
  %v971 = vcombine.high %v969, %v969
  %v973 = vunpack.c.l.s4 1966171168
  %v974 = vunpack.c.0.s8 %v973
  %v975 = vlaneseq
  %v976 = vshrl.u32 %v975, 7
  %v977 = vsub.s32 %v974, %v976
  %v978 = vrot.slane %v962, %v977
  %v980 = vunpack.c.l.s4 1966171168
  %v981 = vunpack.c.0.s8 %v980
  %v982 = vlaneseq
  %v983 = vshrl.u32 %v982, 7
  %v984 = vsub.s32 %v981, %v983
  %v985 = vrot.slane %v969, %v984
  %v987 = vunpack.c.l.s4 1966171168
  %v988 = vunpack.c.0.s8 %v987
  %v989 = vlaneseq
  %v990 = vshrl.u32 %v989, 7
  %v991 = vsub.s32 %v988, %v990
  %v992 = vrot.slane %v970, %v991
  %v994 = vunpack.c.l.s4 1966171168
  %v995 = vunpack.c.0.s8 %v994
  %v996 = vlaneseq
  %v997 = vshrl.u32 %v996, 7
  %v998 = vsub.s32 %v995, %v997
  %v999 = vrot.slane %v971, %v998
  %v1000 = vcombine.high %v978, %v978
  %v1001 = vcombine.high %v985, %v985
  %v1002 = vcombine.high %v992, %v992
  %v1003 = vcombine.high %v999, %v999
  %v1005 = vunpack.c.l.s4 1966171168
  %v1006 = vunpack.c.0.s8 %v1005
  %v1007 = vlaneseq
  %v1008 = vshrl.u32 %v1007, 7
  %v1009 = vsub.s32 %v1006, %v1008
  %v1010 = vrot.slane %v899, %v1009
  %v1011 = vcombine.high %v1010, %v1010
  %v1013 = vunpack.c.l.s4 1966171168
  %v1014 = vunpack.c.0.s8 %v1013
  %v1015 = vlaneseq
  %v1016 = vshrl.u32 %v1015, 7
  %v1017 = vsub.s32 %v1014, %v1016
  %v1018 = vrot.slane %v1010, %v1017
  %v1020 = vunpack.c.l.s4 1966171168
  %v1021 = vunpack.c.0.s8 %v1020
  %v1022 = vlaneseq
  %v1023 = vshrl.u32 %v1022, 7
  %v1024 = vsub.s32 %v1021, %v1023
  %v1025 = vrot.slane %v1011, %v1024
  %v1045 = vunpack.c.l.s4 1966171168
  %v1046 = vunpack.c.0.s8 %v1045
  %v1047 = vlaneseq
  %v1048 = vshrl.u32 %v1047, 7
  %v1049 = vsub.s32 %v1046, %v1048
  %v1050 = vrot.slane %v25, %v1049
  %v1051 = vcombine.high %v1050, %v1050
  %v1053 = vunpack.c.l.s4 1966171168
  %v1054 = vunpack.c.0.s8 %v1053
  %v1055 = vlaneseq
  %v1056 = vshrl.u32 %v1055, 7
  %v1057 = vsub.s32 %v1054, %v1056
  %v1058 = vrot.slane %v1050, %v1057
  %v1060 = vunpack.c.l.s4 1966171168
  %v1061 = vunpack.c.0.s8 %v1060
  %v1062 = vlaneseq
  %v1063 = vshrl.u32 %v1062, 7
  %v1064 = vsub.s32 %v1061, %v1063
  %v1065 = vrot.slane %v1051, %v1064
  %v1066 = vlaneseq
  %v1067 = vshrl.u32 %v1066, 7
  %v1068 = vsub.s32 0, %v1067
  %v1069 = vrot.slane %v1058, %v1068
  %v1070 = vlaneseq
  %v1071 = vshrl.u32 %v1070, 7
  %v1072 = vsub.s32 0, %v1071
  %v1073 = vrot.slane %v1065, %v1072
  %v1075 = vunpack.c.l.s4 1966171168
  %v1076 = vunpack.c.0.s8 %v1075
  %v1077 = vlaneseq
  %v1078 = vshrl.u32 %v1077, 7
  %v1079 = vsub.s32 %v1076, %v1078
  %v1080 = vrot.slane %v1069, %v1079
  %v1081 = vcombine.high %v1080, %v1080
  %v1083 = vunpack.c.l.s4 1966171168
  %v1084 = vunpack.c.0.s8 %v1083
  %v1085 = vlaneseq
  %v1086 = vshrl.u32 %v1085, 7
  %v1087 = vsub.s32 %v1084, %v1086
  %v1088 = vrot.slane %v1080, %v1087
  %v1090 = vunpack.c.l.s4 1966171168
  %v1091 = vunpack.c.0.s8 %v1090
  %v1092 = vlaneseq
  %v1093 = vshrl.u32 %v1092, 7
  %v1094 = vsub.s32 %v1091, %v1093
  %v1095 = vrot.slane %v1081, %v1094
  %v1096 = vcombine.high %v1088, %v1088
  %v1098 = vunpack.c.l.s4 1966171168
  %v1099 = vunpack.c.0.s8 %v1098
  %v1100 = vlaneseq
  %v1101 = vshrl.u32 %v1100, 7
  %v1102 = vsub.s32 %v1099, %v1101
  %v1103 = vrot.slane %v1073, %v1102
  %v1104 = vcombine.high %v1103, %v1103
  %v1106 = vunpack.c.l.s4 1966171168
  %v1107 = vunpack.c.0.s8 %v1106
  %v1108 = vlaneseq
  %v1109 = vshrl.u32 %v1108, 7
  %v1110 = vsub.s32 %v1107, %v1109
  %v1111 = vrot.slane %v1103, %v1110
  %v1113 = vunpack.c.l.s4 1966171168
  %v1114 = vunpack.c.0.s8 %v1113
  %v1115 = vlaneseq
  %v1116 = vshrl.u32 %v1115, 7
  %v1117 = vsub.s32 %v1114, %v1116
  %v1118 = vrot.slane %v1104, %v1117
  %v1119 = vcombine.high %v1111, %v1111
  %v1126 = vadd.f32 %v929, %v1088
  %v1127 = vadd.f32 %v943, %v1095
  %v1128 = vadd.f32 %v951, %v1096
  %v1129 = vadd.f32 %v953, %v1088
  %v1130 = vadd.f32 %v936, %v1095
  %v1131 = vadd.f32 %v950, %v1096
  %v1132 = vadd.f32 %v952, %v1088
  %v1133 = vadd.f32 %v954, %v1095
  %v1134 = vadd.f32 %v978, %v1096
  %v1135 = vadd.f32 %v992, %v1111
  %v1136 = vadd.f32 %v1000, %v1118
  %v1137 = vadd.f32 %v1002, %v1119
  %v1138 = vadd.f32 %v985, %v1111
  %v1139 = vadd.f32 %v999, %v1118
  %v1140 = vadd.f32 %v1001, %v1119
  %v1141 = vadd.f32 %v1003, %v1111
  %v1142 = vadd.f32 %v1018, %v1118
  %v1143 = vadd.f32 %v1025, %v1119
  %v1144 = vmax.f32 %v1126, 0.0
  %v1145 = vmax.f32 %v1127, 0.0
  %v1146 = vmax.f32 %v1128, 0.0
  %v1147 = vmax.f32 %v1129, 0.0
  %v1148 = vmax.f32 %v1130, 0.0
  %v1149 = vmax.f32 %v1131, 0.0
  %v1150 = vmax.f32 %v1132, 0.0
  %v1151 = vmax.f32 %v1133, 0.0
  %v1152 = vmax.f32 %v1134, 0.0
  %v1153 = vmax.f32 %v1135, 0.0
  %v1154 = vmax.f32 %v1136, 0.0
  %v1155 = vmax.f32 %v1137, 0.0
  %v1156 = vmax.f32 %v1138, 0.0
  %v1157 = vmax.f32 %v1139, 0.0
  %v1158 = vmax.f32 %v1140, 0.0
  %v1159 = vmax.f32 %v1141, 0.0
  %v1160 = vmax.f32 %v1142, 0.0
  %v1161 = vmax.f32 %v1143, 0.0
  %v1162 = vlaneseq
  %v1163 = vshrl.u32 %v1162, 7
  %v1164 = vsub.s32 0, %v1163
  %v1165 = vrot.slane %v902, %v1164
  %v1166 = vadd.f32 %v1165, %v25
  %v1167 = vmax.f32 %v1166, 0.0
  %v1170 = vunpack.c.l.s4 1966171168
  %v1171 = vunpack.c.0.s8 %v1170
  %v1172 = vlaneseq
  %v1173 = vshrl.u32 %v1172, 7
  %v1174 = vsub.s32 %v1171, %v1173
  %v1175 = vrot.slane %v1167, %v1174
  %v1176 = vcombine.high %v1175, %v1175
  %v1178 = vunpack.c.l.s4 1966171168
  %v1179 = vunpack.c.0.s8 %v1178
  %v1180 = vlaneseq
  %v1181 = vshrl.u32 %v1180, 7
  %v1182 = vsub.s32 %v1179, %v1181
  %v1183 = vrot.slane %v1175, %v1182
  %v1185 = vunpack.c.l.s4 1966171168
  %v1186 = vunpack.c.0.s8 %v1185
  %v1187 = vlaneseq
  %v1188 = vshrl.u32 %v1187, 7
  %v1189 = vsub.s32 %v1186, %v1188
  %v1190 = vrot.slane %v1176, %v1189
  %v1193 = vlaneseq
  %v1194 = vshrl.u32 %v1193, 7
  %v1195 = vsub.s32 0, %v1194
  %v1196 = vrot.slane %v1183, %v1195
  %v1197 = vlaneseq
  %v1198 = vshrl.u32 %v1197, 7
  %v1199 = vsub.s32 0, %v1198
  %v1200 = vrot.slane %v1190, %v1199
  %v1219 = vcombine.low %v1144, %v1145
  %v1221 = vunpack.c.l.s4 1966171168
  %v1222 = vunpack.c.0.s8 %v1221
  %v1223 = vlaneseq
  %v1224 = vshrl.u32 %v1223, 7
  %v1225 = vsub.s32 %v1222, %v1224
  %v1226 = vrot.slane %v1219, %v1225
  %v1228 = vunpack.c.l.s4 1966171168
  %v1229 = vunpack.c.0.s8 %v1228
  %v1230 = vlaneseq
  %v1231 = vshrl.u32 %v1230, 7
  %v1232 = vsub.s32 %v1229, %v1231
  %v1233 = vrot.slane %v1146, %v1232
  %v1234 = vcombine.low %v1226, %v1233
  %v1236 = vunpack.c.l.s4 1966171168
  %v1237 = vunpack.c.0.s8 %v1236
  %v1238 = vlaneseq
  %v1239 = vshrl.u32 %v1238, 7
  %v1240 = vsub.s32 %v1237, %v1239
  %v1241 = vrot.slane %v1234, %v1240
  %v1242 = vcombine.low %v1147, %v1148
  %v1244 = vunpack.c.l.s4 1966171168
  %v1245 = vunpack.c.0.s8 %v1244
  %v1246 = vlaneseq
  %v1247 = vshrl.u32 %v1246, 7
  %v1248 = vsub.s32 %v1245, %v1247
  %v1249 = vrot.slane %v1242, %v1248
  %v1251 = vunpack.c.l.s4 1966171168
  %v1252 = vunpack.c.0.s8 %v1251
  %v1253 = vlaneseq
  %v1254 = vshrl.u32 %v1253, 7
  %v1255 = vsub.s32 %v1252, %v1254
  %v1256 = vrot.slane %v1149, %v1255
  %v1257 = vcombine.low %v1249, %v1256
  %v1259 = vunpack.c.l.s4 1966171168
  %v1260 = vunpack.c.0.s8 %v1259
  %v1261 = vlaneseq
  %v1262 = vshrl.u32 %v1261, 7
  %v1263 = vsub.s32 %v1260, %v1262
  %v1264 = vrot.slane %v1257, %v1263
  %v1265 = vcombine.low %v1150, %v1151
  %v1267 = vunpack.c.l.s4 1966171168
  %v1268 = vunpack.c.0.s8 %v1267
  %v1269 = vlaneseq
  %v1270 = vshrl.u32 %v1269, 7
  %v1271 = vsub.s32 %v1268, %v1270
  %v1272 = vrot.slane %v1265, %v1271
  %v1274 = vunpack.c.l.s4 1966171168
  %v1275 = vunpack.c.0.s8 %v1274
  %v1276 = vlaneseq
  %v1277 = vshrl.u32 %v1276, 7
  %v1278 = vsub.s32 %v1275, %v1277
  %v1279 = vrot.slane %v1152, %v1278
  %v1280 = vcombine.low %v1272, %v1279
  %v1282 = vunpack.c.l.s4 1966171168
  %v1283 = vunpack.c.0.s8 %v1282
  %v1284 = vlaneseq
  %v1285 = vshrl.u32 %v1284, 7
  %v1286 = vsub.s32 %v1283, %v1285
  %v1287 = vrot.slane %v1280, %v1286
  %v1288 = vcombine.low %v1153, %v1154
  %v1290 = vunpack.c.l.s4 1966171168
  %v1291 = vunpack.c.0.s8 %v1290
  %v1292 = vlaneseq
  %v1293 = vshrl.u32 %v1292, 7
  %v1294 = vsub.s32 %v1291, %v1293
  %v1295 = vrot.slane %v1288, %v1294
  %v1297 = vunpack.c.l.s4 1966171168
  %v1298 = vunpack.c.0.s8 %v1297
  %v1299 = vlaneseq
  %v1300 = vshrl.u32 %v1299, 7
  %v1301 = vsub.s32 %v1298, %v1300
  %v1302 = vrot.slane %v1155, %v1301
  %v1303 = vcombine.low %v1295, %v1302
  %v1305 = vunpack.c.l.s4 1966171168
  %v1306 = vunpack.c.0.s8 %v1305
  %v1307 = vlaneseq
  %v1308 = vshrl.u32 %v1307, 7
  %v1309 = vsub.s32 %v1306, %v1308
  %v1310 = vrot.slane %v1303, %v1309
  %v1311 = vcombine.low %v1156, %v1157
  %v1313 = vunpack.c.l.s4 1966171168
  %v1314 = vunpack.c.0.s8 %v1313
  %v1315 = vlaneseq
  %v1316 = vshrl.u32 %v1315, 7
  %v1317 = vsub.s32 %v1314, %v1316
  %v1318 = vrot.slane %v1311, %v1317
  %v1320 = vunpack.c.l.s4 1966171168
  %v1321 = vunpack.c.0.s8 %v1320
  %v1322 = vlaneseq
  %v1323 = vshrl.u32 %v1322, 7
  %v1324 = vsub.s32 %v1321, %v1323
  %v1325 = vrot.slane %v1158, %v1324
  %v1326 = vcombine.low %v1318, %v1325
  %v1328 = vunpack.c.l.s4 1966171168
  %v1329 = vunpack.c.0.s8 %v1328
  %v1330 = vlaneseq
  %v1331 = vshrl.u32 %v1330, 7
  %v1332 = vsub.s32 %v1329, %v1331
  %v1333 = vrot.slane %v1326, %v1332
  %v1334 = vcombine.low %v1159, %v1160
  %v1336 = vunpack.c.l.s4 1966171168
  %v1337 = vunpack.c.0.s8 %v1336
  %v1338 = vlaneseq
  %v1339 = vshrl.u32 %v1338, 7
  %v1340 = vsub.s32 %v1337, %v1339
  %v1341 = vrot.slane %v1334, %v1340
  %v1343 = vunpack.c.l.s4 1966171168
  %v1344 = vunpack.c.0.s8 %v1343
  %v1345 = vlaneseq
  %v1346 = vshrl.u32 %v1345, 7
  %v1347 = vsub.s32 %v1344, %v1346
  %v1348 = vrot.slane %v1161, %v1347
  %v1349 = vcombine.low %v1341, %v1348
  %v1351 = vunpack.c.l.s4 1966171168
  %v1352 = vunpack.c.0.s8 %v1351
  %v1353 = vlaneseq
  %v1354 = vshrl.u32 %v1353, 7
  %v1355 = vsub.s32 %v1352, %v1354
  %v1356 = vrot.slane %v1349, %v1355
  %v1357 = vrot.slane %v1196, 7
  %v1358 = vrot.slane %v1241, 7
  %v1359 = vrot.slane %v1264, 7
  %v1360 = vrot.slane %v1287, 7
  %v1361 = vrot.slane %v1200, 7
  %v1362 = vrot.slane %v1310, 7
  %v1363 = vrot.slane %v1333, 7
  %v1364 = vrot.slane %v1356, 7
  %v1375 = vsel %vm177, %v1183, %v1357
  %v1376 = vsel %vm177, %v1183, %v1358
  %v1377 = vsel %vm177, %v1183, %v1359
  %v1378 = vsel %vm177, %v1183, %v1360
  %v1379 = vsel %vm177, %v1190, %v1361
  %v1380 = vsel %vm177, %v1190, %v1362
  %v1381 = vsel %vm177, %v1190, %v1363
  %v1382 = vsel %vm177, %v1190, %v1364
  %v1383 = vsel %vm203, %v1375, %v1196
  %v1384 = vsel %vm203, %v1376, %v1196
  %v1385 = vsel %vm203, %v1377, %v1196
  %v1386 = vsel %vm203, %v1378, %v1196
  %v1387 = vsel %vm203, %v1379, %v1200
  %v1388 = vsel %vm203, %v1380, %v1200
  %v1389 = vsel %vm203, %v1381, %v1200
  %v1390 = vsel %vm203, %v1382, %v1200
  %vm1391 = vcmask 126976
  %1392 = vst.msk [vmem:[%s2] sm:$0x1f] %vm1391, %v1383
  %1393 = vst.msk [vmem:[%s2 + $0x8] sm:$0x1f] %vm1391, %v1384
  %1394 = vst.msk [vmem:[%s2 + $0x10] sm:$0x1f] %vm1391, %v1385
  %1395 = vst.msk [vmem:[%s2 + $0x18] sm:$0x1f] %vm1391, %v1386
  %1396 = vst.msk [vmem:[%s2 + $0x20] sm:$0x1f] %vm1391, %v1383
  %1397 = vst.msk [vmem:[%s2 + $0x28] sm:$0x1f] %vm1391, %v1387
  %1398 = vst.msk [vmem:[%s2 + $0x30] sm:$0x1f] %vm1391, %v1388
  %1399 = vst.msk [vmem:[%s2 + $0x38] sm:$0x1f] %vm1391, %v1389
  %1400 = vst.msk [vmem:[%s2 + $0x40] sm:$0x1f] %vm1391, %v1390
  %1401 = vst.msk [vmem:[%s2 + $0x48] sm:$0x1f] %vm1391, %v1387
  // Predicated region
  $region10: #{bottleneck_forward.1} parent=0 // pred_check
    _
  $region11: #{bottleneck_forward.1} parent=0 // pred_check_branch
    %1403 = sbr.rel (0) target = $region13
  $region12: #{bottleneck_forward.1} parent=0 // pred_region
    _
  $region13: #{bottleneck_forward.1} parent=0 // pred_fallthru
    _
  // Predicated region
  $region14: #{bottleneck_forward.1} parent=0 // pred_check
    _
  $region15: #{bottleneck_forward.1} parent=0 // pred_check_branch
    %1405 = sbr.rel (0) target = $region17
  $region16: #{bottleneck_forward.1} parent=0 // pred_region
    _
  $region17: #{bottleneck_forward.1} parent=0 // pred_fallthru
    _

</llo_original>
